<compile_context>
chip_gen: v6e
topology: v6e:2x2x1
jax: 0.10.0
libtpu: 0.0.40
codegen_flags: <defaults>
</compile_context>

<pallas_src>
import functools

import jax
import jax.numpy as jnp
from jax.experimental import pallas as pl
from jax.experimental.pallas import tpu as pltpu


def _mlp_kernel(num_linear, *refs):
    """Whole MLP in one grid step, (features, batch) orientation.

    refs = (x_ref, w0, b0, w1, b1, ..., w_{L-1}, b_{L-1}, o_ref)
      x_ref : (1, tile_n)            batch on lanes
      w0    : (hidden, 1), b0: (hidden, 1)
      w_i   : (hidden, hidden) in (out, in) layout, b_i: (hidden, 1)
      w_last: (hidden, 1) (column of the (1, hidden) PyTorch weight), b_last: (1, 1)
      o_ref : (1, tile_n)
    """
    x_ref = refs[0]
    o_ref = refs[-1]
    wb = refs[1:-1]

    xb = x_ref[...]                                  # (1, tile_n)

    # Layer 0 (1 -> hidden): K=1 rank-1 outer product -> VPU broadcast multiply,
    # no MXU push/drain wasted on a degenerate matmul.
    h = wb[0][...] * xb + wb[1][...]                 # (hidden, tile_n)
    h = jnp.maximum(h, 0.0)                          # activation_fn == ReLU

    # Hidden layers (hidden -> hidden): the only real MXU work, lane-dense N=tile_n.
    for layer in range(1, num_linear - 1):
        w = wb[2 * layer][...]                       # (hidden, hidden) (out, in)
        b = wb[2 * layer + 1][...]                   # (hidden, 1)
        h = jnp.dot(w, h, preferred_element_type=jnp.float32) + b
        h = jnp.maximum(h, 0.0)

    # Last layer (hidden -> 1): N=1 matmul replaced by a sublane reduce.
    w_last = wb[2 * (num_linear - 1)][...]           # (hidden, 1)
    b_last = wb[2 * (num_linear - 1) + 1][...]       # (1, 1)
    out = jnp.sum(w_last * h, axis=0, keepdims=True) + b_last   # (1, tile_n)
    o_ref[...] = out.astype(o_ref.dtype)


def _round_up(v, m):
    return ((v + m - 1) // m) * m


def simple_net_forward(x, weights, biases, *, tile_n=None):
    """x: (N, 1) f32. weights[i]: (out_i, in_i) PyTorch layout. biases[i]: (out_i,)."""
    N, in_dim = x.shape
    assert in_dim == 1
    num_linear = len(weights)
    assert num_linear >= 2, "SimpleNet always has at least an input and output Linear"
    hidden = weights[0].shape[0]

    if tile_n is None:
        # Largest sensible tile, but keep >= 2 grid steps when N allows it so the
        # 'parallel' batch axis can shard across v7x's two TensorCores.
        tile_n = min(2048, _round_up(max(pl.cdiv(N, 2), 1), 128))
    n_pad = _round_up(N, tile_n)
    grid = n_pad // tile_n

    # Batch on lanes: x -> (1, N), zero-padded to (1, n_pad).
    x_t = jnp.pad(x.astype(jnp.float32).reshape(1, N), ((0, 0), (0, n_pad - N)))

    operands = [x_t]
    in_specs = [pl.BlockSpec((1, tile_n), lambda i: (0, i))]

    # Parameters in kernel layout (all tiny; resident as full VMEM blocks).
    params = [
        weights[0].reshape(hidden, 1).astype(jnp.float32),   # (hidden, 1)
        biases[0].reshape(hidden, 1).astype(jnp.float32),     # (hidden, 1)
    ]
    for l in range(1, num_linear - 1):
        params.append(weights[l].astype(jnp.float32))          # (hidden, hidden)
        params.append(biases[l].reshape(hidden, 1).astype(jnp.float32))
    params.append(weights[-1].reshape(hidden, 1).astype(jnp.float32))  # (1,hidden)->column
    params.append(biases[-1].reshape(1, 1).astype(jnp.float32))

    for p in params:
        operands.append(p)
        in_specs.append(pl.BlockSpec(p.shape, lambda i: (0, 0)))   # full-array blocks

    out_spec = pl.BlockSpec((1, tile_n), lambda i: (0, i))
    kernel = functools.partial(_mlp_kernel, num_linear)

    o_t = pl.pallas_call(
        kernel,
        out_shape=jax.ShapeDtypeStruct((1, n_pad), jnp.float32),
        grid_spec=pltpu.PrefetchScalarGridSpec(
            num_scalar_prefetch=0,
            grid=(grid,),
            in_specs=in_specs,
            out_specs=out_spec,
        ),
        compiler_params=pltpu.CompilerParams(
            dimension_semantics=("parallel",),
        ),
    )(*operands)

    return o_t[0, :N].reshape(N, 1)


def init_simple_net_params(key, num_layers=2, hidden_dim=64):
    """PyTorch-layout params mirroring nn.Linear default U(-1/sqrt(fan_in), +)."""
    dims = [1] + [hidden_dim] * num_layers + [1]
    weights, biases = [], []
    for i in range(len(dims) - 1):
        fan_in, fan_out = dims[i], dims[i + 1]
        key, wk, bk = jax.random.split(key, 3)
        bound = 1.0 / jnp.sqrt(jnp.float32(fan_in))
        w = jax.random.uniform(wk, (fan_out, fan_in), jnp.float32, -bound, bound)
        b = jax.random.uniform(bk, (fan_out,), jnp.float32, -bound, bound)
        weights.append(w)
        biases.append(b)
    return weights, biases


def reference_forward(x, weights, biases):
    h = x
    for i, (w, b) in enumerate(zip(weights, biases)):
        h = jnp.dot(h, w.T, precision=jax.lax.Precision.HIGHEST) + b[None, :]
        if i != len(weights) - 1:
            h = jnp.maximum(h, 0.0)
    return h


if __name__ == "__main__":
    key = jax.random.PRNGKey(0)

    # App defaults: hidden_dim=64, num_layers=2, x = np.linspace(-2, 2, 200).reshape(-1, 1)
    hidden_dim = 64
    num_layers = 2
    N = 200

    x = jnp.linspace(-2.0, 2.0, N, dtype=jnp.float32).reshape(-1, 1)
    weights, biases = init_simple_net_params(key, num_layers=num_layers, hidden_dim=hidden_dim)

    out = simple_net_forward(x, weights, biases)
    out = jax.block_until_ready(out)

    ref = reference_forward(x, weights, biases)
    assert out.shape == (N, 1)
    assert jnp.allclose(out, ref, atol=1e-4, rtol=1e-3), "mismatch vs reference"

    print("KERNEL_OK")
</pallas_src>

<mosaic_0001>
module attributes {stable_mosaic.version = 11 : i64} {
  func.func @_mlp_kernel(%arg0: i32, %arg1: memref<1x128xf32, #tpu.memory_space<vmem>>, %arg2: memref<64x1xf32, #tpu.memory_space<vmem>>, %arg3: memref<64x1xf32, #tpu.memory_space<vmem>>, %arg4: memref<64x64xf32, #tpu.memory_space<vmem>>, %arg5: memref<64x1xf32, #tpu.memory_space<vmem>>, %arg6: memref<64x1xf32, #tpu.memory_space<vmem>>, %arg7: memref<1x1xf32, #tpu.memory_space<vmem>>, %arg8: memref<1x128xf32, #tpu.memory_space<vmem>>) attributes {dimension_semantics = [#tpu.dimension_semantics<parallel>], iteration_bounds = array<i64: 2>, scalar_prefetch = 0 : i64, scratch_operands = 0 : i64, tpu.core_type = #tpu.core_type<tc>, window_params = [{transform_indices = @transform_0, window_bounds = array<i64: 1, 128>}, {pipeline_mode = #tpu.pipeline_mode<synchronous>, transform_indices = @transform_1, window_bounds = array<i64: 64, 1>}, {pipeline_mode = #tpu.pipeline_mode<synchronous>, transform_indices = @transform_2, window_bounds = array<i64: 64, 1>}, {pipeline_mode = #tpu.pipeline_mode<synchronous>, transform_indices = @transform_3, window_bounds = array<i64: 64, 64>}, {pipeline_mode = #tpu.pipeline_mode<synchronous>, transform_indices = @transform_4, window_bounds = array<i64: 64, 1>}, {pipeline_mode = #tpu.pipeline_mode<synchronous>, transform_indices = @transform_5, window_bounds = array<i64: 64, 1>}, {pipeline_mode = #tpu.pipeline_mode<synchronous>, transform_indices = @transform_6, window_bounds = array<i64: 1, 1>}, {transform_indices = @transform_7, window_bounds = array<i64: 1, 128>}]} {
    %c0 = arith.constant 0 : index
    %c0_0 = arith.constant 0 : index
    %0 = vector.load %arg1[%c0, %c0_0] : memref<1x128xf32, #tpu.memory_space<vmem>>, vector<1x128xf32>
    %c0_1 = arith.constant 0 : index
    %c0_2 = arith.constant 0 : index
    %1 = vector.load %arg2[%c0_1, %c0_2] : memref<64x1xf32, #tpu.memory_space<vmem>>, vector<64x1xf32>
    %2 = vector.broadcast %1 : vector<64x1xf32> to vector<64x128xf32>
    %3 = vector.broadcast %0 : vector<1x128xf32> to vector<64x128xf32>
    %4 = arith.mulf %2, %3 : vector<64x128xf32>
    %c0_3 = arith.constant 0 : index
    %c0_4 = arith.constant 0 : index
    %5 = vector.load %arg3[%c0_3, %c0_4] : memref<64x1xf32, #tpu.memory_space<vmem>>, vector<64x1xf32>
    %6 = vector.broadcast %5 : vector<64x1xf32> to vector<64x128xf32>
    %7 = arith.addf %4, %6 : vector<64x128xf32>
    %cst = arith.constant 0.000000e+00 : f32
    %8 = vector.broadcast %cst : f32 to vector<64x128xf32>
    %9 = arith.maximumf %7, %8 : vector<64x128xf32>
    %c0_5 = arith.constant 0 : index
    %c0_6 = arith.constant 0 : index
    %10 = vector.load %arg4[%c0_5, %c0_6] : memref<64x64xf32, #tpu.memory_space<vmem>>, vector<64x64xf32>
    %c0_7 = arith.constant 0 : index
    %c0_8 = arith.constant 0 : index
    %11 = vector.load %arg5[%c0_7, %c0_8] : memref<64x1xf32, #tpu.memory_space<vmem>>, vector<64x1xf32>
    %cst_9 = arith.constant dense<0.000000e+00> : vector<64x128xf32>
    %12 = tpu.matmul %10, %9, %cst_9 {dimension_numbers = #tpu.dot_dimension_numbers<[1], [0], [0], [1], [0, 0, 1, 1], [], []>} : vector<64x64xf32>, vector<64x128xf32>, vector<64x128xf32> -> vector<64x128xf32>
    %13 = vector.broadcast %11 : vector<64x1xf32> to vector<64x128xf32>
    %14 = arith.addf %12, %13 : vector<64x128xf32>
    %cst_10 = arith.constant 0.000000e+00 : f32
    %15 = vector.broadcast %cst_10 : f32 to vector<64x128xf32>
    %16 = arith.maximumf %14, %15 : vector<64x128xf32>
    %c0_11 = arith.constant 0 : index
    %c0_12 = arith.constant 0 : index
    %17 = vector.load %arg6[%c0_11, %c0_12] : memref<64x1xf32, #tpu.memory_space<vmem>>, vector<64x1xf32>
    %c0_13 = arith.constant 0 : index
    %c0_14 = arith.constant 0 : index
    %18 = vector.load %arg7[%c0_13, %c0_14] : memref<1x1xf32, #tpu.memory_space<vmem>>, vector<1x1xf32>
    %19 = vector.broadcast %17 : vector<64x1xf32> to vector<64x128xf32>
    %20 = arith.mulf %19, %16 : vector<64x128xf32>
    %cst_15 = arith.constant dense<0.000000e+00> : vector<128xf32>
    %21 = vector.multi_reduction <add>, %20, %cst_15 [0] : vector<64x128xf32> to vector<128xf32>
    %22 = vector.shape_cast %21 : vector<128xf32> to vector<1x128xf32>
    %23 = vector.broadcast %18 : vector<1x1xf32> to vector<1x128xf32>
    %24 = arith.addf %22, %23 : vector<1x128xf32>
    %c0_16 = arith.constant 0 : index
    %c0_17 = arith.constant 0 : index
    %25 = vector.load %arg8[%c0_16, %c0_17] : memref<1x128xf32, #tpu.memory_space<vmem>>, vector<1x128xf32>
    tpu.vector_store %arg8[%c0_16, %c0_17], %24 {strides = array<i32>} : memref<1x128xf32, #tpu.memory_space<vmem>>, vector<1x128xf32>,
    return
  }
  func.func @transform_0(%arg0: i32) -> (i32, i32) {
    %c0_i32 = arith.constant 0 : i32
    %c0_i32_0 = arith.constant 0 : i32
    return %c0_i32, %arg0 : i32, i32
  }
  func.func @transform_1(%arg0: i32) -> (i32, i32) {
    %c0_i32 = arith.constant 0 : i32
    %c0_i32_0 = arith.constant 0 : i32
    %c0_i32_1 = arith.constant 0 : i32
    return %c0_i32, %c0_i32_0 : i32, i32
  }
  func.func @transform_2(%arg0: i32) -> (i32, i32) {
    %c0_i32 = arith.constant 0 : i32
    %c0_i32_0 = arith.constant 0 : i32
    %c0_i32_1 = arith.constant 0 : i32
    return %c0_i32, %c0_i32_0 : i32, i32
  }
  func.func @transform_3(%arg0: i32) -> (i32, i32) {
    %c0_i32 = arith.constant 0 : i32
    %c0_i32_0 = arith.constant 0 : i32
    %c0_i32_1 = arith.constant 0 : i32
    return %c0_i32, %c0_i32_0 : i32, i32
  }
  func.func @transform_4(%arg0: i32) -> (i32, i32) {
    %c0_i32 = arith.constant 0 : i32
    %c0_i32_0 = arith.constant 0 : i32
    %c0_i32_1 = arith.constant 0 : i32
    return %c0_i32, %c0_i32_0 : i32, i32
  }
  func.func @transform_5(%arg0: i32) -> (i32, i32) {
    %c0_i32 = arith.constant 0 : i32
    %c0_i32_0 = arith.constant 0 : i32
    %c0_i32_1 = arith.constant 0 : i32
    return %c0_i32, %c0_i32_0 : i32, i32
  }
  func.func @transform_6(%arg0: i32) -> (i32, i32) {
    %c0_i32 = arith.constant 0 : i32
    %c0_i32_0 = arith.constant 0 : i32
    %c0_i32_1 = arith.constant 0 : i32
    return %c0_i32, %c0_i32_0 : i32, i32
  }
  func.func @transform_7(%arg0: i32) -> (i32, i32) {
    %c0_i32 = arith.constant 0 : i32
    %c0_i32_0 = arith.constant 0 : i32
    return %c0_i32, %arg0 : i32, i32
  }
}

</mosaic_0001>

<llo_original>
// kernel: tpu_custom_call.1
$region0: #{tpu_custom_call.1}
  #allocation0 [shape = 'u32[]', space=smem, size = 0x4, offset = 0x4, fixed_abs, tag = 'smem constant byte address 0x4 - core index']
  #allocation1 [shape = 'u32[144,128]{1,0:T(1,128)}', space=vmem, size = 0x12000, scoped, tag = 'internal scratch']
  #allocation2 [shape = 'f32[1,1]{1,0:T(1,128)S(1)}', space=vmem, size = 0x200, scoped, tag = 'scoped memory for tpu_custom_call.1']
  %s0 = inlined_call_operand.vmem [shape: f32[1,256], index: 0, kind: input, shape index: {}]
  %s1 = inlined_call_operand.vmem [shape: f32[64,1], index: 1, kind: input, shape index: {}]
  %s2 = inlined_call_operand.vmem [shape: f32[64,1], index: 2, kind: input, shape index: {}]
  %s3 = inlined_call_operand.vmem [shape: f32[64,64], index: 3, kind: input, shape index: {}]
  %s4 = inlined_call_operand.vmem [shape: f32[64,1], index: 4, kind: input, shape index: {}]
  %s5 = inlined_call_operand.vmem [shape: f32[64,1], index: 5, kind: input, shape index: {}]
  %s6 = inlined_call_operand.<no memory space> [shape: f32[1,1], index: 6, kind: input, shape index: {}]
  %s7 = inlined_call_operand.hbm [shape: f32[1,256], index: 7, kind: output, shape index: {}]
  %s8 = sld [smem:[#allocation0]]
  $region61: #{tpu_custom_call.1} parent=0
    _
  %s10 = ssub.s32 1, %s8
  %s11 = scalar_select 0, %s10, %s8
  %v12 = vstv %s6
  %13 = vst [vmem:[#allocation2] sm:$0x1] %v12
  $region1: #{tpu_custom_call.1} parent=0
    #allocation3 [shape = 'u8[1024]{0}', space=vmem, size = 0x400, scoped, tag = 'output window, operand 0']
    #allocation4 [shape = 's32[2]{0}', space=sflag, size = 0x8, scoped, tag = 'scoped memory for tpu_custom_call.1']
    %14 = vsyncpa [#allocation4], 0
    %s15 = scalar_lea.sflag [#allocation4], 1
    %16 = vsyncpa %s15, 0
    loop: start=0, step=1, limit=4
    $region2: #{tpu_custom_call.1} parent=1 // loop_pre_header
      _
    $region3: #{tpu_custom_call.1} parent=1 // loop_header
      %s18 = sphi 0, %s22
      %p19 = scmp.ge.s32.totalorder %s18, 4
      %s28 = sphi 0, %s30
      %s31 = sphi 0, %s28
      %s32 = sphi 0, %s31
      %s48 = sphi 0, %s32
      %s52 = sphi 0, %s52
      %s54 = sphi 0, %s52
      %s55 = sphi 0, %s54
      %s69 = sphi 0, %s55
      %s73 = sphi 0, %s73
      %s75 = sphi 0, %s73
      %s76 = sphi 0, %s75
      %s90 = sphi 0, %s76
      %s94 = sphi 0, %s94
      %s96 = sphi 0, %s94
      %s97 = sphi 0, %s96
      %s111 = sphi 0, %s97
      %s115 = sphi 0, %s115
      %s117 = sphi 0, %s115
      %s118 = sphi 0, %s117
      %s132 = sphi 0, %s118
      %s136 = sphi 0, %s136
      %s138 = sphi 0, %s136
      %s139 = sphi 0, %s138
      %s153 = sphi 0, %s139
      %s157 = sphi 0, %s157
      %s159 = sphi 0, %s157
      %s160 = sphi 0, %s159
      %s174 = sphi 0, %s160
      %s180 = sphi 0, %s182
      %s183 = sphi 0, %s180
      %s184 = sphi 0, %s183
      %s200 = sphi 0, %s184
    $region4: #{tpu_custom_call.1} parent=1 // loop_header_branch
      %21 = sbr.rel (%p19) target = $region8
    $region5: #{tpu_custom_call.1} parent=1 // loop_body
      %s23 = ssub.s32 %s18, 1
      %s24 = ssub.s32 %s18, 2
      %s25 = sadd.s32 %s18, 1
      %s26 = ssub.s32 %s18, %s25
      %p27 = scmp.eq.s32.totalorder %s26, 0
      %s29 = sadd.s32 %s28, 1
      %s30 = scalar_select %p27, %s28, %s29
      %p33 = pneg %p27
      %p34 = scmp.eq.s32.totalorder %s18, 1
      %p35 = por %p33, %p34
      %p36 = scmp.ne.s32.totalorder %s28, %s31
      %p37 = scmp.eq.s32.totalorder %s18, 0
      %p38 = por %p36, %p37
      %p39 = scmp.ne.s32.totalorder %s28, %s31
      %p40 = scmp.eq.s32.totalorder %s23, 1
      %p41 = por %p39, %p40
      %p42 = scmp.ne.s32.totalorder %s31, %s32
      %p43 = scmp.eq.s32.totalorder %s23, 0
      %p44 = por %p42, %p43
      %p45 = scmp.ne.s32.totalorder %s31, %s32
      %p46 = scmp.eq.s32.totalorder %s24, 1
      %p47 = por %p45, %p46
      %p49 = scmp.ne.s32.totalorder %s32, %s48
      %p50 = scmp.eq.s32.totalorder %s24, 0
      %p51 = por %p49, %p50
      %s53 = sadd.s32 %s52, 1
      %p56 = scmp.eq.s32.totalorder %s18, 1
      %p57 = scmp.ne.s32.totalorder %s52, %s54
      %p58 = scmp.eq.s32.totalorder %s18, 0
      %p59 = por %p57, %p58
      %p60 = scmp.ne.s32.totalorder %s52, %s54
      %p61 = scmp.eq.s32.totalorder %s23, 1
      %p62 = por %p60, %p61
      %p63 = scmp.ne.s32.totalorder %s54, %s55
      %p64 = scmp.eq.s32.totalorder %s23, 0
      %p65 = por %p63, %p64
      %p66 = scmp.ne.s32.totalorder %s54, %s55
      %p67 = scmp.eq.s32.totalorder %s24, 1
      %p68 = por %p66, %p67
      %p70 = scmp.ne.s32.totalorder %s55, %s69
      %p71 = scmp.eq.s32.totalorder %s24, 0
      %p72 = por %p70, %p71
      %s74 = sadd.s32 %s73, 1
      %p77 = scmp.eq.s32.totalorder %s18, 1
      %p78 = scmp.ne.s32.totalorder %s73, %s75
      %p79 = scmp.eq.s32.totalorder %s18, 0
      %p80 = por %p78, %p79
      %p81 = scmp.ne.s32.totalorder %s73, %s75
      %p82 = scmp.eq.s32.totalorder %s23, 1
      %p83 = por %p81, %p82
      %p84 = scmp.ne.s32.totalorder %s75, %s76
      %p85 = scmp.eq.s32.totalorder %s23, 0
      %p86 = por %p84, %p85
      %p87 = scmp.ne.s32.totalorder %s75, %s76
      %p88 = scmp.eq.s32.totalorder %s24, 1
      %p89 = por %p87, %p88
      %p91 = scmp.ne.s32.totalorder %s76, %s90
      %p92 = scmp.eq.s32.totalorder %s24, 0
      %p93 = por %p91, %p92
      %s95 = sadd.s32 %s94, 1
      %p98 = scmp.eq.s32.totalorder %s18, 1
      %p99 = scmp.ne.s32.totalorder %s94, %s96
      %p100 = scmp.eq.s32.totalorder %s18, 0
      %p101 = por %p99, %p100
      %p102 = scmp.ne.s32.totalorder %s94, %s96
      %p103 = scmp.eq.s32.totalorder %s23, 1
      %p104 = por %p102, %p103
      %p105 = scmp.ne.s32.totalorder %s96, %s97
      %p106 = scmp.eq.s32.totalorder %s23, 0
      %p107 = por %p105, %p106
      %p108 = scmp.ne.s32.totalorder %s96, %s97
      %p109 = scmp.eq.s32.totalorder %s24, 1
      %p110 = por %p108, %p109
      %p112 = scmp.ne.s32.totalorder %s97, %s111
      %p113 = scmp.eq.s32.totalorder %s24, 0
      %p114 = por %p112, %p113
      %s116 = sadd.s32 %s115, 1
      %p119 = scmp.eq.s32.totalorder %s18, 1
      %p120 = scmp.ne.s32.totalorder %s115, %s117
      %p121 = scmp.eq.s32.totalorder %s18, 0
      %p122 = por %p120, %p121
      %p123 = scmp.ne.s32.totalorder %s115, %s117
      %p124 = scmp.eq.s32.totalorder %s23, 1
      %p125 = por %p123, %p124
      %p126 = scmp.ne.s32.totalorder %s117, %s118
      %p127 = scmp.eq.s32.totalorder %s23, 0
      %p128 = por %p126, %p127
      %p129 = scmp.ne.s32.totalorder %s117, %s118
      %p130 = scmp.eq.s32.totalorder %s24, 1
      %p131 = por %p129, %p130
      %p133 = scmp.ne.s32.totalorder %s118, %s132
      %p134 = scmp.eq.s32.totalorder %s24, 0
      %p135 = por %p133, %p134
      %s137 = sadd.s32 %s136, 1
      %p140 = scmp.eq.s32.totalorder %s18, 1
      %p141 = scmp.ne.s32.totalorder %s136, %s138
      %p142 = scmp.eq.s32.totalorder %s18, 0
      %p143 = por %p141, %p142
      %p144 = scmp.ne.s32.totalorder %s136, %s138
      %p145 = scmp.eq.s32.totalorder %s23, 1
      %p146 = por %p144, %p145
      %p147 = scmp.ne.s32.totalorder %s138, %s139
      %p148 = scmp.eq.s32.totalorder %s23, 0
      %p149 = por %p147, %p148
      %p150 = scmp.ne.s32.totalorder %s138, %s139
      %p151 = scmp.eq.s32.totalorder %s24, 1
      %p152 = por %p150, %p151
      %p154 = scmp.ne.s32.totalorder %s139, %s153
      %p155 = scmp.eq.s32.totalorder %s24, 0
      %p156 = por %p154, %p155
      %s158 = sadd.s32 %s157, 1
      %p161 = scmp.eq.s32.totalorder %s18, 1
      %p162 = scmp.ne.s32.totalorder %s157, %s159
      %p163 = scmp.eq.s32.totalorder %s18, 0
      %p164 = por %p162, %p163
      %p165 = scmp.ne.s32.totalorder %s157, %s159
      %p166 = scmp.eq.s32.totalorder %s23, 1
      %p167 = por %p165, %p166
      %p168 = scmp.ne.s32.totalorder %s159, %s160
      %p169 = scmp.eq.s32.totalorder %s23, 0
      %p170 = por %p168, %p169
      %p171 = scmp.ne.s32.totalorder %s159, %s160
      %p172 = scmp.eq.s32.totalorder %s24, 1
      %p173 = por %p171, %p172
      %p175 = scmp.ne.s32.totalorder %s160, %s174
      %p176 = scmp.eq.s32.totalorder %s24, 0
      %p177 = por %p175, %p176
      %s178 = ssub.s32 %s18, %s25
      %p179 = scmp.eq.s32.totalorder %s178, 0
      %s181 = sadd.s32 %s180, 1
      %s182 = scalar_select %p179, %s180, %s181
      %p185 = pneg %p179
      %p186 = scmp.eq.s32.totalorder %s18, 1
      %p187 = por %p185, %p186
      %p188 = scmp.ne.s32.totalorder %s180, %s183
      %p189 = scmp.eq.s32.totalorder %s18, 0
      %p190 = por %p188, %p189
      %p191 = scmp.ne.s32.totalorder %s180, %s183
      %p192 = scmp.eq.s32.totalorder %s23, 1
      %p193 = por %p191, %p192
      %p194 = scmp.ne.s32.totalorder %s183, %s184
      %p195 = scmp.eq.s32.totalorder %s23, 0
      %p196 = por %p194, %p195
      %p197 = scmp.ne.s32.totalorder %s183, %s184
      %p198 = scmp.eq.s32.totalorder %s24, 1
      %p199 = por %p197, %p198
      %p201 = scmp.ne.s32.totalorder %s184, %s200
      %p202 = scmp.eq.s32.totalorder %s24, 0
      %p203 = por %p201, %p202
      %p204 = scmp.le.s32.totalorder 1, %s18
      %p205 = scmp.lt.s32.totalorder %s18, 3
      %p206 = pnand %p204, %p205
      %p207 = pneg %p206
      // Predicated region
      $region9: #{tpu_custom_call.1} parent=5 // pred_check
        _
      $region10: #{tpu_custom_call.1} parent=5 // pred_check_branch
        %209 = sbr.rel (%p206) target = $region12
      $region11: #{tpu_custom_call.1} parent=5 // pred_region
        %s210 = ssub.s32 %s18, 1
        // Predicated region
        $region13: #{tpu_custom_call.1} parent=11 // pred_check
          %p211 = pneg %p65
        $region14: #{tpu_custom_call.1} parent=11 // pred_check_branch
          %213 = sbr.rel (%p211) target = $region16
        $region15: #{tpu_custom_call.1} parent=11 // pred_region
          _
        $region16: #{tpu_custom_call.1} parent=11 // pred_fallthru
          _
        // Predicated region
        $region17: #{tpu_custom_call.1} parent=11 // pred_check
          %p214 = pneg %p86
        $region18: #{tpu_custom_call.1} parent=11 // pred_check_branch
          %216 = sbr.rel (%p214) target = $region20
        $region19: #{tpu_custom_call.1} parent=11 // pred_region
          _
        $region20: #{tpu_custom_call.1} parent=11 // pred_fallthru
          _
        // Predicated region
        $region21: #{tpu_custom_call.1} parent=11 // pred_check
          %p217 = pneg %p107
        $region22: #{tpu_custom_call.1} parent=11 // pred_check_branch
          %219 = sbr.rel (%p217) target = $region24
        $region23: #{tpu_custom_call.1} parent=11 // pred_region
          _
        $region24: #{tpu_custom_call.1} parent=11 // pred_fallthru
          _
        // Predicated region
        $region25: #{tpu_custom_call.1} parent=11 // pred_check
          %p220 = pneg %p128
        $region26: #{tpu_custom_call.1} parent=11 // pred_check_branch
          %222 = sbr.rel (%p220) target = $region28
        $region27: #{tpu_custom_call.1} parent=11 // pred_region
          _
        $region28: #{tpu_custom_call.1} parent=11 // pred_fallthru
          _
        // Predicated region
        $region29: #{tpu_custom_call.1} parent=11 // pred_check
          %p223 = pneg %p149
        $region30: #{tpu_custom_call.1} parent=11 // pred_check_branch
          %225 = sbr.rel (%p223) target = $region32
        $region31: #{tpu_custom_call.1} parent=11 // pred_region
          _
        $region32: #{tpu_custom_call.1} parent=11 // pred_fallthru
          _
        // Predicated region
        $region33: #{tpu_custom_call.1} parent=11 // pred_check
          %p226 = pneg %p170
        $region34: #{tpu_custom_call.1} parent=11 // pred_check_branch
          %228 = sbr.rel (%p226) target = $region36
        $region35: #{tpu_custom_call.1} parent=11 // pred_region
          _
        $region36: #{tpu_custom_call.1} parent=11 // pred_fallthru
          _
      $region12: #{tpu_custom_call.1} parent=5 // pred_fallthru
        _
      %p229 = scmp.lt.s32.totalorder %s18, 2
      // Predicated region
      $region37: #{tpu_custom_call.1} parent=5 // pred_check
        %p230 = pneg %p229
      $region38: #{tpu_custom_call.1} parent=5 // pred_check_branch
        %232 = sbr.rel (%p230) target = $region40
      $region39: #{tpu_custom_call.1} parent=5 // pred_region
        // Predicated region
        $region41: #{tpu_custom_call.1} parent=39 // pred_check
          %p233 = pneg %p38
        $region42: #{tpu_custom_call.1} parent=39 // pred_check_branch
          %235 = sbr.rel (%p233) target = $region44
        $region43: #{tpu_custom_call.1} parent=39 // pred_region
          %p236 = scmp.lt.s32.totalorder %s18, 1
          %s237 = scalar_select %p236, %s18, 1
          %s238 = scalar_lea.vmem %s0, %s237
        $region44: #{tpu_custom_call.1} parent=39 // pred_fallthru
          _
      $region40: #{tpu_custom_call.1} parent=5 // pred_fallthru
        _
      %p239 = scmp.le.s32.totalorder 1, %s18
      %p240 = scmp.lt.s32.totalorder %s18, 3
      %p241 = pnand %p239, %p240
      %p242 = pneg %p241
      // Predicated region
      $region45: #{tpu_custom_call.1} parent=5 // pred_check
        _
      $region46: #{tpu_custom_call.1} parent=5 // pred_check_branch
        %244 = sbr.rel (%p241) target = $region48
      $region47: #{tpu_custom_call.1} parent=5 // pred_region
        %s245 = ssub.s32 %s18, 1
        %p246 = scmp.lt.s32.totalorder %s23, 1
        %s247 = scalar_select %p246, %s23, 1
        %s248 = scalar_lea.vmem %s0, %s247
        %p249 = pneg %p44
        %p250 = pneg %p41
        %p251 = pneg %p65
        %p252 = pneg %p62
        %p253 = pneg %p86
        %p254 = pneg %p83
        %p255 = pneg %p107
        %p256 = pneg %p104
        %p257 = pneg %p128
        %p258 = pneg %p125
        %p259 = pneg %p149
        %p260 = pneg %p146
        %p261 = pneg %p170
        %p262 = pneg %p167
        %p263 = pneg %p196
        %p264 = pneg %p193
        %s265 = sand.u32 %s183, 1
        %s266 = scalar_lea.sflag [#allocation4], %s265
        %s267 = sand.u32 %s183, 1
        %s268 = scalar_lea.vmem [#allocation3], %s267
        %p269 = scmp.lt.s32.totalorder %s23, 1
        %s270 = scalar_select %p269, %s23, 1
        %s271 = scalar_lea.vmem %s0, %s270
        %v272 = vld [vmem:[%s271] sm:$0x1]
        %v273 = vld [vmem:[%s1] sm:$0xff]
        %v274 = vld [vmem:[%s1 + $0x8] sm:$0xff]
        %v275 = vld [vmem:[%s1 + $0x10] sm:$0xff]
        %v276 = vld [vmem:[%s1 + $0x18] sm:$0xff]
        %v277 = vld [vmem:[%s1 + $0x20] sm:$0xff]
        %v278 = vld [vmem:[%s1 + $0x28] sm:$0xff]
        %v279 = vld [vmem:[%s1 + $0x30] sm:$0xff]
        %v280 = vld [vmem:[%s1 + $0x38] sm:$0xff]
        %282 = vset.pattern.permute.xlu0 0
        %283 = vperm.xlu0 %282, %v273
        %v284 = vpop.permute.xlu0 %283
        %287 = vset.pattern.permute.xlu0 0
        %288 = vperm.xlu0 %287, %v274
        %v289 = vpop.permute.xlu0 %288
        %292 = vset.pattern.permute.xlu0 0
        %293 = vperm.xlu0 %292, %v275
        %v294 = vpop.permute.xlu0 %293
        %297 = vset.pattern.permute.xlu0 0
        %298 = vperm.xlu0 %297, %v276
        %v299 = vpop.permute.xlu0 %298
        %302 = vset.pattern.permute.xlu0 0
        %303 = vperm.xlu0 %302, %v277
        %v304 = vpop.permute.xlu0 %303
        %307 = vset.pattern.permute.xlu0 0
        %308 = vperm.xlu0 %307, %v278
        %v309 = vpop.permute.xlu0 %308
        %312 = vset.pattern.permute.xlu0 0
        %313 = vperm.xlu0 %312, %v279
        %v314 = vpop.permute.xlu0 %313
        %317 = vset.pattern.permute.xlu0 0
        %318 = vperm.xlu0 %317, %v280
        %v319 = vpop.permute.xlu0 %318
        %v322 = vlaneseq
        %v323 = vshrl.u32 %v322, 7
        %v324 = vsub.s32 0, %v323
        %v325 = vrot.slane %v272, %v324
        %v327 = vmul.f32 %v284, %v325
        %v328 = vmul.f32 %v289, %v325
        %v329 = vmul.f32 %v294, %v325
        %v330 = vmul.f32 %v299, %v325
        %v331 = vmul.f32 %v304, %v325
        %v332 = vmul.f32 %v309, %v325
        %v333 = vmul.f32 %v314, %v325
        %v334 = vmul.f32 %v319, %v325
        %v335 = vld [vmem:[%s2] sm:$0xff]
        %v336 = vld [vmem:[%s2 + $0x8] sm:$0xff]
        %v337 = vld [vmem:[%s2 + $0x10] sm:$0xff]
        %v338 = vld [vmem:[%s2 + $0x18] sm:$0xff]
        %v339 = vld [vmem:[%s2 + $0x20] sm:$0xff]
        %v340 = vld [vmem:[%s2 + $0x28] sm:$0xff]
        %v341 = vld [vmem:[%s2 + $0x30] sm:$0xff]
        %v342 = vld [vmem:[%s2 + $0x38] sm:$0xff]
        %344 = vset.pattern.permute.xlu0 0
        %345 = vperm.xlu0 %344, %v335
        %v346 = vpop.permute.xlu0 %345
        %349 = vset.pattern.permute.xlu0 0
        %350 = vperm.xlu0 %349, %v336
        %v351 = vpop.permute.xlu0 %350
        %354 = vset.pattern.permute.xlu0 0
        %355 = vperm.xlu0 %354, %v337
        %v356 = vpop.permute.xlu0 %355
        %359 = vset.pattern.permute.xlu0 0
        %360 = vperm.xlu0 %359, %v338
        %v361 = vpop.permute.xlu0 %360
        %364 = vset.pattern.permute.xlu0 0
        %365 = vperm.xlu0 %364, %v339
        %v366 = vpop.permute.xlu0 %365
        %369 = vset.pattern.permute.xlu0 0
        %370 = vperm.xlu0 %369, %v340
        %v371 = vpop.permute.xlu0 %370
        %374 = vset.pattern.permute.xlu0 0
        %375 = vperm.xlu0 %374, %v341
        %v376 = vpop.permute.xlu0 %375
        %379 = vset.pattern.permute.xlu0 0
        %380 = vperm.xlu0 %379, %v342
        %v381 = vpop.permute.xlu0 %380
        %v383 = vadd.f32 %v327, %v346
        %v384 = vadd.f32 %v328, %v351
        %v385 = vadd.f32 %v329, %v356
        %v386 = vadd.f32 %v330, %v361
        %v387 = vadd.f32 %v331, %v366
        %v388 = vadd.f32 %v332, %v371
        %v389 = vadd.f32 %v333, %v376
        %v390 = vadd.f32 %v334, %v381
        %v391 = vmax.f32 %v383, 0.0
        %v392 = vmax.f32 %v384, 0.0
        %v393 = vmax.f32 %v385, 0.0
        %v394 = vmax.f32 %v386, 0.0
        %v395 = vmax.f32 %v387, 0.0
        %v396 = vmax.f32 %v388, 0.0
        %v397 = vmax.f32 %v389, 0.0
        %v398 = vmax.f32 %v390, 0.0
        %v399 = vld [vmem:[%s3] sm:$0xff]
        %v400 = vld [vmem:[%s3 + $0x8] sm:$0xff]
        %v401 = vld [vmem:[%s3 + $0x10] sm:$0xff]
        %v402 = vld [vmem:[%s3 + $0x18] sm:$0xff]
        %v403 = vld [vmem:[%s3 + $0x20] sm:$0xff]
        %v404 = vld [vmem:[%s3 + $0x28] sm:$0xff]
        %v405 = vld [vmem:[%s3 + $0x30] sm:$0xff]
        %v406 = vld [vmem:[%s3 + $0x38] sm:$0xff]
        %v407 = vld [vmem:[%s4] sm:$0xff]
        %v408 = vld [vmem:[%s4 + $0x8] sm:$0xff]
        %v409 = vld [vmem:[%s4 + $0x10] sm:$0xff]
        %v410 = vld [vmem:[%s4 + $0x18] sm:$0xff]
        %v411 = vld [vmem:[%s4 + $0x20] sm:$0xff]
        %v412 = vld [vmem:[%s4 + $0x28] sm:$0xff]
        %v413 = vld [vmem:[%s4 + $0x30] sm:$0xff]
        %v414 = vld [vmem:[%s4 + $0x38] sm:$0xff]
        %416 = vset.pattern.permute.xlu0 0
        %417 = vperm.xlu0 %416, %v407
        %v418 = vpop.permute.xlu0 %417
        %421 = vset.pattern.permute.xlu0 0
        %422 = vperm.xlu0 %421, %v408
        %v423 = vpop.permute.xlu0 %422
        %426 = vset.pattern.permute.xlu0 0
        %427 = vperm.xlu0 %426, %v409
        %v428 = vpop.permute.xlu0 %427
        %431 = vset.pattern.permute.xlu0 0
        %432 = vperm.xlu0 %431, %v410
        %v433 = vpop.permute.xlu0 %432
        %436 = vset.pattern.permute.xlu0 0
        %437 = vperm.xlu0 %436, %v411
        %v438 = vpop.permute.xlu0 %437
        %441 = vset.pattern.permute.xlu0 0
        %442 = vperm.xlu0 %441, %v412
        %v443 = vpop.permute.xlu0 %442
        %446 = vset.pattern.permute.xlu0 0
        %447 = vperm.xlu0 %446, %v413
        %v448 = vpop.permute.xlu0 %447
        %451 = vset.pattern.permute.xlu0 0
        %452 = vperm.xlu0 %451, %v414
        %v453 = vpop.permute.xlu0 %452
        %vm455 = vcmask 523264
        %v457 = vsel %vm455, %v399, 0
        %v460 = vsel %vm455, %v400, 0
        %v463 = vsel %vm455, %v401, 0
        %v466 = vsel %vm455, %v402, 0
        %v469 = vsel %vm455, %v403, 0
        %v472 = vsel %vm455, %v404, 0
        %v475 = vsel %vm455, %v405, 0
        %v478 = vsel %vm455, %v406, 0
        %480 = vmatprep.subr.mxu0 0.0
        %481 = vmatpush1.msra.mxu0 0.0
        %482 = vmatprep.subr.mxu0 0.0
        %483 = vmatpush1.msra.mxu0 0.0
        %484 = vmatprep.subr.mxu0 0.0
        %485 = vmatpush1.msra.mxu0 0.0
        %486 = vmatprep.subr.mxu0 0.0
        %487 = vmatpush1.msra.mxu0 0.0
        %488 = vmatprep.subr.mxu0 0.0
        %489 = vmatpush1.msra.mxu0 0.0
        %490 = vmatprep.subr.mxu0 0.0
        %491 = vmatpush1.msra.mxu0 0.0
        %492 = vmatprep.subr.mxu0 0.0
        %493 = vmatpush1.msra.mxu0 0.0
        %494 = vmatprep.subr.mxu0 0.0
        %495 = vmatpush1.msra.mxu0 0.0
        %496 = vmatprep.subr.mxu0 0.0
        %497 = vmatpush1.msra.mxu0 %v398
        %498 = vmatprep.subr.mxu0 0.0
        %499 = vmatpush1.msra.mxu0 %v397
        %500 = vmatprep.subr.mxu0 0.0
        %501 = vmatpush1.msra.mxu0 %v396
        %502 = vmatprep.subr.mxu0 0.0
        %503 = vmatpush1.msra.mxu0 %v395
        %504 = vmatprep.subr.mxu0 0.0
        %505 = vmatpush1.msra.mxu0 %v394
        %506 = vmatprep.subr.mxu0 0.0
        %507 = vmatpush1.msra.mxu0 %v393
        %508 = vmatprep.subr.mxu0 0.0
        %509 = vmatpush1.msra.mxu0 %v392
        %510 = vmatprep.subr.mxu0 0.0
        %511 = vmatpush1.msra.mxu0 %v391
        %512 = vmatprep.subr.mxu0 0.0
        %513 = vmatpush2.msra.mxu0 0.0
        %514 = vmatprep.subr.mxu0 0.0
        %515 = vmatpush2.msra.mxu0 0.0
        %516 = vmatprep.subr.mxu0 0.0
        %517 = vmatpush2.msra.mxu0 0.0
        %518 = vmatprep.subr.mxu0 0.0
        %519 = vmatpush2.msra.mxu0 0.0
        %520 = vmatprep.subr.mxu0 0.0
        %521 = vmatpush2.msra.mxu0 0.0
        %522 = vmatprep.subr.mxu0 0.0
        %523 = vmatpush2.msra.mxu0 0.0
        %524 = vmatprep.subr.mxu0 0.0
        %525 = vmatpush2.msra.mxu0 0.0
        %526 = vmatprep.subr.mxu0 0.0
        %527 = vmatpush2.msra.mxu0 0.0
        %528 = vmatprep.subr.mxu0 0.0
        %529 = vmatpush2.msra.mxu0 0.0
        %530 = vmatprep.subr.mxu0 0.0
        %531 = vmatpush2.msra.mxu0 0.0
        %532 = vmatprep.subr.mxu0 0.0
        %533 = vmatpush2.msra.mxu0 0.0
        %534 = vmatprep.subr.mxu0 0.0
        %535 = vmatpush2.msra.mxu0 0.0
        %536 = vmatprep.subr.mxu0 0.0
        %537 = vmatpush2.msra.mxu0 0.0
        %538 = vmatprep.subr.mxu0 0.0
        %539 = vmatpush2.msra.mxu0 0.0
        %540 = vmatprep.subr.mxu0 0.0
        %541 = vmatpush2.msra.mxu0 0.0
        %542 = vmatprep.subr.mxu0 0.0
        %543 = vmatpush2.msra.mxu0 0.0
        %544 = vmatprep.mubr.f32.mxu0 0.0
        %545 = vmatmul.mubr.f32.gmra.mxu0 %v457
        %v546 = vpop.f32.mrf.mxu0
        %v547 = vadd.f32 %v418, %v546
        %v548 = vpop.f32.mrf.mxu0
        %549 = vmatprep.mubr.f32.mxu0 0.0
        %550 = vmatmul.mubr.f32.gmra.mxu0 %v460
        %v551 = vpop.f32.mrf.mxu0
        %v552 = vadd.f32 %v423, %v551
        %v553 = vpop.f32.mrf.mxu0
        %554 = vmatprep.mubr.f32.mxu0 0.0
        %555 = vmatmul.mubr.f32.gmra.mxu0 %v463
        %v556 = vpop.f32.mrf.mxu0
        %v557 = vadd.f32 %v428, %v556
        %v558 = vpop.f32.mrf.mxu0
        %559 = vmatprep.mubr.f32.mxu0 0.0
        %560 = vmatmul.mubr.f32.gmra.mxu0 %v466
        %v561 = vpop.f32.mrf.mxu0
        %v562 = vadd.f32 %v433, %v561
        %v563 = vpop.f32.mrf.mxu0
        %564 = vmatprep.mubr.f32.mxu0 0.0
        %565 = vmatmul.mubr.f32.gmra.mxu0 %v469
        %v566 = vpop.f32.mrf.mxu0
        %v567 = vadd.f32 %v438, %v566
        %v568 = vpop.f32.mrf.mxu0
        %569 = vmatprep.mubr.f32.mxu0 0.0
        %570 = vmatmul.mubr.f32.gmra.mxu0 %v472
        %v571 = vpop.f32.mrf.mxu0
        %v572 = vadd.f32 %v443, %v571
        %v573 = vpop.f32.mrf.mxu0
        %574 = vmatprep.mubr.f32.mxu0 0.0
        %575 = vmatmul.mubr.f32.gmra.mxu0 %v475
        %v576 = vpop.f32.mrf.mxu0
        %v577 = vadd.f32 %v448, %v576
        %v578 = vpop.f32.mrf.mxu0
        %579 = vmatprep.mubr.f32.mxu0 0.0
        %580 = vmatmul.mubr.f32.gmra.mxu0 %v478
        %v581 = vpop.f32.mrf.mxu0
        %v582 = vadd.f32 %v453, %v581
        %v583 = vpop.f32.mrf.mxu0
        %584 = vdwg.mxu0
        %v585 = vmax.f32 %v547, 0.0
        %v586 = vmax.f32 %v552, 0.0
        %v587 = vmax.f32 %v557, 0.0
        %v588 = vmax.f32 %v562, 0.0
        %v589 = vmax.f32 %v567, 0.0
        %v590 = vmax.f32 %v572, 0.0
        %v591 = vmax.f32 %v577, 0.0
        %v592 = vmax.f32 %v582, 0.0
        %v593 = vld [vmem:[%s5] sm:$0xff]
        %v594 = vld [vmem:[%s5 + $0x8] sm:$0xff]
        %v595 = vld [vmem:[%s5 + $0x10] sm:$0xff]
        %v596 = vld [vmem:[%s5 + $0x18] sm:$0xff]
        %v597 = vld [vmem:[%s5 + $0x20] sm:$0xff]
        %v598 = vld [vmem:[%s5 + $0x28] sm:$0xff]
        %v599 = vld [vmem:[%s5 + $0x30] sm:$0xff]
        %v600 = vld [vmem:[%s5 + $0x38] sm:$0xff]
        %v601 = vld [vmem:[#allocation2] sm:$0x1]
        %603 = vset.pattern.permute.xlu0 0
        %604 = vperm.xlu0 %603, %v593
        %v605 = vpop.permute.xlu0 %604
        %608 = vset.pattern.permute.xlu0 0
        %609 = vperm.xlu0 %608, %v594
        %v610 = vpop.permute.xlu0 %609
        %613 = vset.pattern.permute.xlu0 0
        %614 = vperm.xlu0 %613, %v595
        %v615 = vpop.permute.xlu0 %614
        %618 = vset.pattern.permute.xlu0 0
        %619 = vperm.xlu0 %618, %v596
        %v620 = vpop.permute.xlu0 %619
        %623 = vset.pattern.permute.xlu0 0
        %624 = vperm.xlu0 %623, %v597
        %v625 = vpop.permute.xlu0 %624
        %628 = vset.pattern.permute.xlu0 0
        %629 = vperm.xlu0 %628, %v598
        %v630 = vpop.permute.xlu0 %629
        %633 = vset.pattern.permute.xlu0 0
        %634 = vperm.xlu0 %633, %v599
        %v635 = vpop.permute.xlu0 %634
        %638 = vset.pattern.permute.xlu0 0
        %639 = vperm.xlu0 %638, %v600
        %v640 = vpop.permute.xlu0 %639
        %v642 = vmul.f32 %v605, %v585
        %v643 = vmul.f32 %v610, %v586
        %v644 = vmul.f32 %v615, %v587
        %v645 = vmul.f32 %v620, %v588
        %v646 = vmul.f32 %v625, %v589
        %v647 = vmul.f32 %v630, %v590
        %v648 = vmul.f32 %v635, %v591
        %v649 = vmul.f32 %v640, %v592
        %v650 = vadd.f32 %v642, %v643
        %v651 = vadd.f32 %v650, %v644
        %v652 = vadd.f32 %v651, %v645
        %v653 = vadd.f32 %v652, %v646
        %v654 = vadd.f32 %v653, %v647
        %v655 = vadd.f32 %v654, %v648
        %v656 = vadd.f32 %v655, %v649
        %v657 = vrot.slane %v656, 4
        %v658 = vadd.f32 %v656, %v657
        %v659 = vrot.slane %v658, 2
        %v660 = vadd.f32 %v658, %v659
        %v661 = vrot.slane %v660, 1
        %v662 = vadd.f32 %v660, %v661
        %664 = vset.pattern.permute.xlu0 0
        %665 = vperm.xlu0 %664, %v601
        %v666 = vpop.permute.xlu0 %665
        %v668 = vlaneseq
        %v669 = vshrl.u32 %v668, 7
        %v670 = vsub.s32 0, %v669
        %v671 = vrot.slane %v666, %v670
        %v672 = vadd.f32 %v662, %v671
        %673 = vst [vmem:[%s268] sm:$0x1] %v672
        %s674 = sand.u32 %s183, 1
        %s675 = scalar_lea.sflag [#allocation4], %s674
        %s676 = sand.u32 %s183, 1
        %s677 = scalar_lea.vmem [#allocation3], %s676
        // Predicated region
        $region49: #{tpu_custom_call.1} parent=47 // pred_check
          %p678 = pneg %p193
        $region50: #{tpu_custom_call.1} parent=47 // pred_check_branch
          %680 = sbr.rel (%p678) target = $region52
        $region51: #{tpu_custom_call.1} parent=47 // pred_region
          %s682 = ssub.s32 16, 16
          %683 = vsyncadd %s675, %s682
          %s684 = smul.addr %s23, 16
          %s685 = scalar_lea.hbm %s7, %s684
          %s687 = sshll.u32 %s677, 4
          %s688 = int_to_ptr.vmem [resolvable:$true] %s687
          %690 = dma.vmem_to_hbm [thread:$0]  %s688, 16, %s685, %s675
        $region52: #{tpu_custom_call.1} parent=47 // pred_fallthru
          _
      $region48: #{tpu_custom_call.1} parent=5 // pred_fallthru
        _
      %p691 = scmp.le.s32.totalorder 2, %s18
      // Predicated region
      $region53: #{tpu_custom_call.1} parent=5 // pred_check
        %p692 = pneg %p691
      $region54: #{tpu_custom_call.1} parent=5 // pred_check_branch
        %694 = sbr.rel (%p692) target = $region56
      $region55: #{tpu_custom_call.1} parent=5 // pred_region
        %s695 = ssub.s32 %s18, 2
        // Predicated region
        $region57: #{tpu_custom_call.1} parent=55 // pred_check
          %p696 = pneg %p199
        $region58: #{tpu_custom_call.1} parent=55 // pred_check_branch
          %698 = sbr.rel (%p696) target = $region60
        $region59: #{tpu_custom_call.1} parent=55 // pred_region
          %s699 = sand.u32 %s184, 1
          %s700 = scalar_lea.sflag [#allocation4], %s699
          %s701 = sand.u32 %s184, 1
          %s702 = scalar_lea.vmem [#allocation3], %s701
          %703 = dma.done %s700, 16
        $region60: #{tpu_custom_call.1} parent=55 // pred_fallthru
          _
      $region56: #{tpu_custom_call.1} parent=5 // pred_fallthru
        _
    $region6: #{tpu_custom_call.1} parent=1 // loop_footer
      %s22 = sadd.s32 1, %s18
    $region7: #{tpu_custom_call.1} parent=1 // loop_footer_branch
      %17 = sbr.rel target = $region3
    $region8: #{tpu_custom_call.1} parent=1 // loop_exit
      _
    %704 = vsyncpa [#allocation4], 1
    %s705 = scalar_lea.sflag [#allocation4], 1
    %706 = vsyncpa %s705, 1

</llo_original>
